<compile_context>
chip_gen: v7x
topology: tpu7x:2x2x1
jax: 0.10.0
libtpu: 0.0.40
codegen_flags: <defaults>
</compile_context>

<pallas_src>
import numpy as np
import jax
import jax.numpy as jnp
from jax.experimental import pallas as pl
from jax.experimental.pallas import tpu as pltpu


# ----------------------------------------------------------------------------
# Host-side construction of the separable / combined linear operators
# ----------------------------------------------------------------------------
def adaptive_pool_matrix(out_size: int, in_size: int) -> np.ndarray:
    """Row-stochastic averaging matrix reproducing nn.AdaptiveAvgPool2d per axis."""
    m = np.zeros((out_size, in_size), dtype=np.float32)
    for i in range(out_size):
        s = (i * in_size) // out_size
        e = -(-((i + 1) * in_size) // out_size)  # ceil
        m[i, s:e] = 1.0 / (e - s)
    return m


def bilinear_matrix(out_size: int, in_size: int) -> np.ndarray:
    """Interp matrix for bilinear upsample, align_corners=False.

    TODO(synk): very old F.upsample defaulted to align_corners=True; this
    matches modern PyTorch (F.interpolate / deprecated F.upsample) behavior.
    """
    m = np.zeros((out_size, in_size), dtype=np.float32)
    if in_size == 1:
        m[:, 0] = 1.0
        return m
    scale = in_size / out_size
    for o in range(out_size):
        src = max((o + 0.5) * scale - 0.5, 0.0)
        i0 = min(int(np.floor(src)), in_size - 1)
        i1 = min(i0 + 1, in_size - 1)
        w1 = src - i0
        m[o, i0] += 1.0 - w1
        m[o, i1] += w1
    return m


def combined_pool_matrix(ay: np.ndarray, ax: np.ndarray) -> np.ndarray:
    """(H*W, P*P) operator: A[h*W+w, ph*P+pw] = ay[ph,h] * ax[pw,w]."""
    p, h = ay.shape
    q, w = ax.shape
    return np.einsum("ph,qw->hwpq", ay, ax).reshape(h * w, p * q).astype(np.float32)


def combined_upsample_matrix(uy: np.ndarray, ux: np.ndarray) -> np.ndarray:
    """(P*P, H*W) operator: U[ph*P+pw, h*W+w] = uy[h,ph] * ux[w,pw]."""
    h, p = uy.shape
    w, q = ux.shape
    return np.einsum("hp,wq->pqhw", uy, ux).reshape(p * q, h * w).astype(np.float32)


# ----------------------------------------------------------------------------
# Pallas kernel: one image per grid step, zero in-kernel transposes
# ----------------------------------------------------------------------------
def pyramid_pool_kernel(x_ref, a_ref, w_ref, shift_ref, u_ref, out_ref):
    # x_ref:     (1, Cin, H*W)   lane-dense input slab
    # a_ref:     (H*W, P*P)      combined adaptive-avg-pool operator
    # w_ref:     (Cout, Cin)     1x1 conv weight with BN scale folded in
    # shift_ref: (Cout, 1)       folded BN shift
    # u_ref:     (P*P, H*W)      combined bilinear-upsample operator
    # out_ref:   (1, Cout, H*W)  lane-dense output slab
    x = x_ref[0]

    # AdaptiveAvgPool2d(P):  (Cin, H*W) @ (H*W, P*P) -> (Cin, P*P)
    pooled = jnp.dot(x, a_ref[...], preferred_element_type=jnp.float32)

    # 1x1 Conv (BN scale pre-folded):  (Cout, Cin) @ (Cin, P*P) -> (Cout, P*P)
    z = jnp.dot(w_ref[...], pooled, preferred_element_type=jnp.float32)

    # BatchNorm shift + ReLU (VPU elementwise)
    z = jnp.maximum(z + shift_ref[...], 0.0)

    # Bilinear upsample: (Cout, P*P) @ (P*P, H*W) -> (Cout, H*W), already in
    # output layout -> unmasked lane-dense store, no trailing transpose.
    out_ref[0] = jnp.dot(z, u_ref[...],
                         preferred_element_type=jnp.float32).astype(out_ref.dtype)


def pyramid_pool(x, a, wc_folded, shift, u):
    """x: (N, Cin, H, W) NCHW.  Returns (N, Cout, H, W)."""
    n, cin, h, w = x.shape
    hw = h * w
    pp = a.shape[1]
    cout = wc_folded.shape[0]

    # Wrapper-side reshapes are free layout plumbing; the kernel only ever sees
    # lane-dense (C, H*W) slabs.
    x_flat = x.reshape(n, cin, hw)

    out_flat = pl.pallas_call(
        pyramid_pool_kernel,
        out_shape=jax.ShapeDtypeStruct((n, cout, hw), jnp.float32),
        grid_spec=pltpu.PrefetchScalarGridSpec(
            num_scalar_prefetch=0,
            grid=(n,),
            in_specs=[
                pl.BlockSpec((1, cin, hw), lambda i: (i, 0, 0)),
                pl.BlockSpec((hw, pp), lambda i: (0, 0)),
                pl.BlockSpec((cout, cin), lambda i: (0, 0)),
                pl.BlockSpec((cout, 1), lambda i: (0, 0)),
                pl.BlockSpec((pp, hw), lambda i: (0, 0)),
            ],
            out_specs=pl.BlockSpec((1, cout, hw), lambda i: (i, 0, 0)),
        ),
        compiler_params=pltpu.CompilerParams(
            dimension_semantics=("parallel",),
            vmem_limit_bytes=32 * 1024 * 1024,
        ),
    )(x_flat, a, wc_folded, shift, u)

    return out_flat.reshape(n, cout, h, w)


# ----------------------------------------------------------------------------
# Pure-JAX reference (separable einsums, unfolded BN) for correctness check
# ----------------------------------------------------------------------------
def pyramid_pool_ref(x, ay, ax, wc, scale, shift, uy, ux):
    pooled = jnp.einsum("ph,nchw,qw->ncpq", ay, x, ax)
    z = jnp.einsum("oc,ncpq->nopq", wc, pooled)
    z = jnp.maximum(z * scale.reshape(1, -1, 1, 1) + shift.reshape(1, -1, 1, 1), 0.0)
    return jnp.einsum("hp,nopq,wq->nohw", uy, z, ux)


if __name__ == "__main__":
    # Small shapes consistent with the module.
    N, CIN, COUT, H, W, POOL = 2, 4, 4, 16, 16, 2

    key = jax.random.PRNGKey(0)
    kx, kw = jax.random.split(key)
    x = jax.random.normal(kx, (N, CIN, H, W), dtype=jnp.float32)

    # Conv2d(in, out, 1, bias=False) weight: (Cout, Cin, 1, 1) -> (Cout, Cin)
    wc = (jax.random.normal(kw, (COUT, CIN), dtype=jnp.float32)
          * (1.0 / np.sqrt(CIN))).astype(jnp.float32)

    # BatchNorm2d params (deterministic, inference-mode fold).
    gamma = jnp.linspace(0.8, 1.2, COUT, dtype=jnp.float32)
    beta = jnp.linspace(-0.1, 0.1, COUT, dtype=jnp.float32)
    running_mean = jnp.linspace(-0.05, 0.05, COUT, dtype=jnp.float32)
    running_var = jnp.linspace(0.9, 1.1, COUT, dtype=jnp.float32)
    eps = 1e-5
    scale = gamma / jnp.sqrt(running_var + eps)          # (Cout,)
    shift = beta - running_mean * scale                  # (Cout,)

    # Separable pool / upsample matrices, then combined operators (host side).
    ay = adaptive_pool_matrix(POOL, H)                   # (P, H)
    ax = adaptive_pool_matrix(POOL, W)                   # (P, W)
    uy = bilinear_matrix(H, POOL)                        # (H, P)
    ux = bilinear_matrix(W, POOL)                        # (W, P)
    a_comb = jnp.asarray(combined_pool_matrix(ay, ax))   # (H*W, P*P)
    u_comb = jnp.asarray(combined_upsample_matrix(uy, ux))  # (P*P, H*W)

    # Fold BN scale into the conv weight; only the shift enters the kernel.
    wc_folded = (scale.reshape(COUT, 1) * wc).astype(jnp.float32)    # (Cout, Cin)
    shift_col = shift.reshape(COUT, 1).astype(jnp.float32)           # (Cout, 1)

    out = pyramid_pool(x, a_comb, wc_folded, shift_col, u_comb)
    out = jax.block_until_ready(out)

    ref = pyramid_pool_ref(x, jnp.asarray(ay), jnp.asarray(ax), wc, scale, shift,
                           jnp.asarray(uy), jnp.asarray(ux))
    np.testing.assert_allclose(np.asarray(out), np.asarray(ref), rtol=1e-4, atol=1e-4)

    print("KERNEL_OK")
</pallas_src>

<mosaic_0001>
module attributes {stable_mosaic.version = 11 : i64} {
  func.func @pyramid_pool_kernel(%arg0: i32, %arg1: memref<1x4x256xf32, #tpu.memory_space<vmem>>, %arg2: memref<256x4xf32, #tpu.memory_space<vmem>>, %arg3: memref<4x4xf32, #tpu.memory_space<vmem>>, %arg4: memref<4x1xf32, #tpu.memory_space<vmem>>, %arg5: memref<4x256xf32, #tpu.memory_space<vmem>>, %arg6: memref<1x4x256xf32, #tpu.memory_space<vmem>>) attributes {dimension_semantics = [#tpu.dimension_semantics<parallel>], iteration_bounds = array<i64: 2>, scalar_prefetch = 0 : i64, scratch_operands = 0 : i64, tpu.core_type = #tpu.core_type<tc>, window_params = [{transform_indices = @transform_0, window_bounds = array<i64: 1, 4, 256>}, {pipeline_mode = #tpu.pipeline_mode<synchronous>, transform_indices = @transform_1, window_bounds = array<i64: 256, 4>}, {pipeline_mode = #tpu.pipeline_mode<synchronous>, transform_indices = @transform_2, window_bounds = array<i64: 4, 4>}, {pipeline_mode = #tpu.pipeline_mode<synchronous>, transform_indices = @transform_3, window_bounds = array<i64: 4, 1>}, {pipeline_mode = #tpu.pipeline_mode<synchronous>, transform_indices = @transform_4, window_bounds = array<i64: 4, 256>}, {transform_indices = @transform_5, window_bounds = array<i64: 1, 4, 256>}]} {
    %c0 = arith.constant 0 : index
    %c0_0 = arith.constant 0 : index
    %c0_1 = arith.constant 0 : index
    %0 = vector.load %arg1[%c0, %c0_0, %c0_1] : memref<1x4x256xf32, #tpu.memory_space<vmem>>, vector<1x4x256xf32>
    %1 = vector.shape_cast %0 : vector<1x4x256xf32> to vector<4x256xf32>
    %c0_2 = arith.constant 0 : index
    %c0_3 = arith.constant 0 : index
    %2 = vector.load %arg2[%c0_2, %c0_3] : memref<256x4xf32, #tpu.memory_space<vmem>>, vector<256x4xf32>
    %cst = arith.constant dense<0.000000e+00> : vector<4x4xf32>
    %3 = tpu.matmul %1, %2, %cst {dimension_numbers = #tpu.dot_dimension_numbers<[1], [0], [0], [1], [0, 0, 1, 1], [], []>} : vector<4x256xf32>, vector<256x4xf32>, vector<4x4xf32> -> vector<4x4xf32>
    %c0_4 = arith.constant 0 : index
    %c0_5 = arith.constant 0 : index
    %4 = vector.load %arg3[%c0_4, %c0_5] : memref<4x4xf32, #tpu.memory_space<vmem>>, vector<4x4xf32>
    %cst_6 = arith.constant dense<0.000000e+00> : vector<4x4xf32>
    %5 = tpu.matmul %4, %3, %cst_6 {dimension_numbers = #tpu.dot_dimension_numbers<[1], [0], [0], [1], [0, 0, 1, 1], [], []>} : vector<4x4xf32>, vector<4x4xf32>, vector<4x4xf32> -> vector<4x4xf32>
    %c0_7 = arith.constant 0 : index
    %c0_8 = arith.constant 0 : index
    %6 = vector.load %arg4[%c0_7, %c0_8] : memref<4x1xf32, #tpu.memory_space<vmem>>, vector<4x1xf32>
    %7 = vector.broadcast %6 : vector<4x1xf32> to vector<4x4xf32>
    %8 = arith.addf %5, %7 : vector<4x4xf32>
    %cst_9 = arith.constant 0.000000e+00 : f32
    %9 = vector.broadcast %cst_9 : f32 to vector<4x4xf32>
    %10 = arith.maximumf %8, %9 : vector<4x4xf32>
    %c0_10 = arith.constant 0 : index
    %c0_11 = arith.constant 0 : index
    %11 = vector.load %arg5[%c0_10, %c0_11] : memref<4x256xf32, #tpu.memory_space<vmem>>, vector<4x256xf32>
    %cst_12 = arith.constant dense<0.000000e+00> : vector<4x256xf32>
    %12 = tpu.matmul %10, %11, %cst_12 {dimension_numbers = #tpu.dot_dimension_numbers<[1], [0], [0], [1], [0, 0, 1, 1], [], []>} : vector<4x4xf32>, vector<4x256xf32>, vector<4x256xf32> -> vector<4x256xf32>
    %c0_13 = arith.constant 0 : index
    %c0_14 = arith.constant 0 : index
    %c0_15 = arith.constant 0 : index
    %13 = vector.load %arg6[%c0_13, %c0_14, %c0_15] : memref<1x4x256xf32, #tpu.memory_space<vmem>>, vector<1x4x256xf32>
    %14 = vector.shape_cast %13 : vector<1x4x256xf32> to vector<4x256xf32>
    %15 = vector.shape_cast %12 : vector<4x256xf32> to vector<1x4x256xf32>
    tpu.vector_store %arg6[%c0_13, %c0_14, %c0_15], %15 {strides = array<i32>} : memref<1x4x256xf32, #tpu.memory_space<vmem>>, vector<1x4x256xf32>,
    return
  }
  func.func @transform_0(%arg0: i32) -> (i32, i32, i32) {
    %c0_i32 = arith.constant 0 : i32
    %c0_i32_0 = arith.constant 0 : i32
    %c0_i32_1 = arith.constant 0 : i32
    return %arg0, %c0_i32, %c0_i32_0 : i32, i32, i32
  }
  func.func @transform_1(%arg0: i32) -> (i32, i32) {
    %c0_i32 = arith.constant 0 : i32
    %c0_i32_0 = arith.constant 0 : i32
    %c0_i32_1 = arith.constant 0 : i32
    return %c0_i32, %c0_i32_0 : i32, i32
  }
  func.func @transform_2(%arg0: i32) -> (i32, i32) {
    %c0_i32 = arith.constant 0 : i32
    %c0_i32_0 = arith.constant 0 : i32
    %c0_i32_1 = arith.constant 0 : i32
    return %c0_i32, %c0_i32_0 : i32, i32
  }
  func.func @transform_3(%arg0: i32) -> (i32, i32) {
    %c0_i32 = arith.constant 0 : i32
    %c0_i32_0 = arith.constant 0 : i32
    %c0_i32_1 = arith.constant 0 : i32
    return %c0_i32, %c0_i32_0 : i32, i32
  }
  func.func @transform_4(%arg0: i32) -> (i32, i32) {
    %c0_i32 = arith.constant 0 : i32
    %c0_i32_0 = arith.constant 0 : i32
    %c0_i32_1 = arith.constant 0 : i32
    return %c0_i32, %c0_i32_0 : i32, i32
  }
  func.func @transform_5(%arg0: i32) -> (i32, i32, i32) {
    %c0_i32 = arith.constant 0 : i32
    %c0_i32_0 = arith.constant 0 : i32
    %c0_i32_1 = arith.constant 0 : i32
    return %arg0, %c0_i32, %c0_i32_0 : i32, i32, i32
  }
}

</mosaic_0001>

<llo_original>
// kernel: tpu_custom_call.1
$region0: #{tpu_custom_call.1}
  #allocation0 [shape = 'u32[]', space=smem, size = 0x4, offset = 0x4, fixed_abs, tag = 'smem constant byte address 0x4 - core index']
  #allocation1 [shape = 'u32[144,128]{1,0:T(1,128)}', space=vmem, size = 0x12000, scoped, tag = 'internal scratch']
  %s0 = inlined_call_operand.vmem [shape: f32[2,4,256], index: 0, kind: input, shape index: {}]
  %s1 = inlined_call_operand.vmem [shape: f32[256,4], index: 1, kind: input, shape index: {}]
  %s2 = inlined_call_operand.vmem [shape: f32[4,4], index: 2, kind: input, shape index: {}]
  %s3 = inlined_call_operand.vmem [shape: f32[4,1], index: 3, kind: input, shape index: {}]
  %s4 = inlined_call_operand.vmem [shape: f32[4,256], index: 4, kind: input, shape index: {}]
  %s5 = inlined_call_operand.hbm [shape: f32[2,4,256], index: 5, kind: output, shape index: {}]
  %s6 = sld [smem:[#allocation0]]
  $region53: #{tpu_custom_call.1} parent=0
    _
  %s8 = ssub.s32 1, %s6
  %s9 = scalar_select 0, %s8, %s6
  $region1: #{tpu_custom_call.1} parent=0
    #allocation2 [shape = 'u8[8192]{0}', space=vmem, size = 0x2000, scoped, tag = 'output window, operand 0']
    #allocation3 [shape = 's32[2]{0}', space=sflag, size = 0x8, scoped, tag = 'scoped memory for tpu_custom_call.1']
    %10 = vsyncpa [#allocation3], 0
    %s11 = scalar_lea.sflag [#allocation3], 1
    %12 = vsyncpa %s11, 0
    loop: start=0, step=1, limit=4
    $region2: #{tpu_custom_call.1} parent=1 // loop_pre_header
      _
    $region3: #{tpu_custom_call.1} parent=1 // loop_header
      %s14 = sphi 0, %s18
      %p15 = scmp.ge.s32.totalorder %s14, 4
      %s24 = sphi 0, %s26
      %s27 = sphi 0, %s24
      %s28 = sphi 0, %s27
      %s44 = sphi 0, %s28
      %s48 = sphi 0, %s48
      %s50 = sphi 0, %s48
      %s51 = sphi 0, %s50
      %s65 = sphi 0, %s51
      %s69 = sphi 0, %s69
      %s71 = sphi 0, %s69
      %s72 = sphi 0, %s71
      %s86 = sphi 0, %s72
      %s90 = sphi 0, %s90
      %s92 = sphi 0, %s90
      %s93 = sphi 0, %s92
      %s107 = sphi 0, %s93
      %s111 = sphi 0, %s111
      %s113 = sphi 0, %s111
      %s114 = sphi 0, %s113
      %s128 = sphi 0, %s114
      %s134 = sphi 0, %s136
      %s137 = sphi 0, %s134
      %s138 = sphi 0, %s137
      %s154 = sphi 0, %s138
    $region4: #{tpu_custom_call.1} parent=1 // loop_header_branch
      %17 = sbr.rel (%p15) target = $region8
    $region5: #{tpu_custom_call.1} parent=1 // loop_body
      %s19 = ssub.s32 %s14, 1
      %s20 = ssub.s32 %s14, 2
      %s21 = sadd.s32 %s14, 1
      %s22 = ssub.s32 %s14, %s21
      %p23 = scmp.eq.s32.totalorder %s22, 0
      %s25 = sadd.s32 %s24, 1
      %s26 = scalar_select %p23, %s24, %s25
      %p29 = pneg %p23
      %p30 = scmp.eq.s32.totalorder %s14, 1
      %p31 = por %p29, %p30
      %p32 = scmp.ne.s32.totalorder %s24, %s27
      %p33 = scmp.eq.s32.totalorder %s14, 0
      %p34 = por %p32, %p33
      %p35 = scmp.ne.s32.totalorder %s24, %s27
      %p36 = scmp.eq.s32.totalorder %s19, 1
      %p37 = por %p35, %p36
      %p38 = scmp.ne.s32.totalorder %s27, %s28
      %p39 = scmp.eq.s32.totalorder %s19, 0
      %p40 = por %p38, %p39
      %p41 = scmp.ne.s32.totalorder %s27, %s28
      %p42 = scmp.eq.s32.totalorder %s20, 1
      %p43 = por %p41, %p42
      %p45 = scmp.ne.s32.totalorder %s28, %s44
      %p46 = scmp.eq.s32.totalorder %s20, 0
      %p47 = por %p45, %p46
      %s49 = sadd.s32 %s48, 1
      %p52 = scmp.eq.s32.totalorder %s14, 1
      %p53 = scmp.ne.s32.totalorder %s48, %s50
      %p54 = scmp.eq.s32.totalorder %s14, 0
      %p55 = por %p53, %p54
      %p56 = scmp.ne.s32.totalorder %s48, %s50
      %p57 = scmp.eq.s32.totalorder %s19, 1
      %p58 = por %p56, %p57
      %p59 = scmp.ne.s32.totalorder %s50, %s51
      %p60 = scmp.eq.s32.totalorder %s19, 0
      %p61 = por %p59, %p60
      %p62 = scmp.ne.s32.totalorder %s50, %s51
      %p63 = scmp.eq.s32.totalorder %s20, 1
      %p64 = por %p62, %p63
      %p66 = scmp.ne.s32.totalorder %s51, %s65
      %p67 = scmp.eq.s32.totalorder %s20, 0
      %p68 = por %p66, %p67
      %s70 = sadd.s32 %s69, 1
      %p73 = scmp.eq.s32.totalorder %s14, 1
      %p74 = scmp.ne.s32.totalorder %s69, %s71
      %p75 = scmp.eq.s32.totalorder %s14, 0
      %p76 = por %p74, %p75
      %p77 = scmp.ne.s32.totalorder %s69, %s71
      %p78 = scmp.eq.s32.totalorder %s19, 1
      %p79 = por %p77, %p78
      %p80 = scmp.ne.s32.totalorder %s71, %s72
      %p81 = scmp.eq.s32.totalorder %s19, 0
      %p82 = por %p80, %p81
      %p83 = scmp.ne.s32.totalorder %s71, %s72
      %p84 = scmp.eq.s32.totalorder %s20, 1
      %p85 = por %p83, %p84
      %p87 = scmp.ne.s32.totalorder %s72, %s86
      %p88 = scmp.eq.s32.totalorder %s20, 0
      %p89 = por %p87, %p88
      %s91 = sadd.s32 %s90, 1
      %p94 = scmp.eq.s32.totalorder %s14, 1
      %p95 = scmp.ne.s32.totalorder %s90, %s92
      %p96 = scmp.eq.s32.totalorder %s14, 0
      %p97 = por %p95, %p96
      %p98 = scmp.ne.s32.totalorder %s90, %s92
      %p99 = scmp.eq.s32.totalorder %s19, 1
      %p100 = por %p98, %p99
      %p101 = scmp.ne.s32.totalorder %s92, %s93
      %p102 = scmp.eq.s32.totalorder %s19, 0
      %p103 = por %p101, %p102
      %p104 = scmp.ne.s32.totalorder %s92, %s93
      %p105 = scmp.eq.s32.totalorder %s20, 1
      %p106 = por %p104, %p105
      %p108 = scmp.ne.s32.totalorder %s93, %s107
      %p109 = scmp.eq.s32.totalorder %s20, 0
      %p110 = por %p108, %p109
      %s112 = sadd.s32 %s111, 1
      %p115 = scmp.eq.s32.totalorder %s14, 1
      %p116 = scmp.ne.s32.totalorder %s111, %s113
      %p117 = scmp.eq.s32.totalorder %s14, 0
      %p118 = por %p116, %p117
      %p119 = scmp.ne.s32.totalorder %s111, %s113
      %p120 = scmp.eq.s32.totalorder %s19, 1
      %p121 = por %p119, %p120
      %p122 = scmp.ne.s32.totalorder %s113, %s114
      %p123 = scmp.eq.s32.totalorder %s19, 0
      %p124 = por %p122, %p123
      %p125 = scmp.ne.s32.totalorder %s113, %s114
      %p126 = scmp.eq.s32.totalorder %s20, 1
      %p127 = por %p125, %p126
      %p129 = scmp.ne.s32.totalorder %s114, %s128
      %p130 = scmp.eq.s32.totalorder %s20, 0
      %p131 = por %p129, %p130
      %s132 = ssub.s32 %s14, %s21
      %p133 = scmp.eq.s32.totalorder %s132, 0
      %s135 = sadd.s32 %s134, 1
      %s136 = scalar_select %p133, %s134, %s135
      %p139 = pneg %p133
      %p140 = scmp.eq.s32.totalorder %s14, 1
      %p141 = por %p139, %p140
      %p142 = scmp.ne.s32.totalorder %s134, %s137
      %p143 = scmp.eq.s32.totalorder %s14, 0
      %p144 = por %p142, %p143
      %p145 = scmp.ne.s32.totalorder %s134, %s137
      %p146 = scmp.eq.s32.totalorder %s19, 1
      %p147 = por %p145, %p146
      %p148 = scmp.ne.s32.totalorder %s137, %s138
      %p149 = scmp.eq.s32.totalorder %s19, 0
      %p150 = por %p148, %p149
      %p151 = scmp.ne.s32.totalorder %s137, %s138
      %p152 = scmp.eq.s32.totalorder %s20, 1
      %p153 = por %p151, %p152
      %p155 = scmp.ne.s32.totalorder %s138, %s154
      %p156 = scmp.eq.s32.totalorder %s20, 0
      %p157 = por %p155, %p156
      %p158 = scmp.le.s32.totalorder 1, %s14
      %p159 = scmp.lt.s32.totalorder %s14, 3
      %p160 = pnand %p158, %p159
      %p161 = pneg %p160
      // Predicated region
      $region9: #{tpu_custom_call.1} parent=5 // pred_check
        _
      $region10: #{tpu_custom_call.1} parent=5 // pred_check_branch
        %163 = sbr.rel (%p160) target = $region12
      $region11: #{tpu_custom_call.1} parent=5 // pred_region
        %s164 = ssub.s32 %s14, 1
        // Predicated region
        $region13: #{tpu_custom_call.1} parent=11 // pred_check
          %p165 = pneg %p61
        $region14: #{tpu_custom_call.1} parent=11 // pred_check_branch
          %167 = sbr.rel (%p165) target = $region16
        $region15: #{tpu_custom_call.1} parent=11 // pred_region
          _
        $region16: #{tpu_custom_call.1} parent=11 // pred_fallthru
          _
        // Predicated region
        $region17: #{tpu_custom_call.1} parent=11 // pred_check
          %p168 = pneg %p82
        $region18: #{tpu_custom_call.1} parent=11 // pred_check_branch
          %170 = sbr.rel (%p168) target = $region20
        $region19: #{tpu_custom_call.1} parent=11 // pred_region
          _
        $region20: #{tpu_custom_call.1} parent=11 // pred_fallthru
          _
        // Predicated region
        $region21: #{tpu_custom_call.1} parent=11 // pred_check
          %p171 = pneg %p103
        $region22: #{tpu_custom_call.1} parent=11 // pred_check_branch
          %173 = sbr.rel (%p171) target = $region24
        $region23: #{tpu_custom_call.1} parent=11 // pred_region
          _
        $region24: #{tpu_custom_call.1} parent=11 // pred_fallthru
          _
        // Predicated region
        $region25: #{tpu_custom_call.1} parent=11 // pred_check
          %p174 = pneg %p124
        $region26: #{tpu_custom_call.1} parent=11 // pred_check_branch
          %176 = sbr.rel (%p174) target = $region28
        $region27: #{tpu_custom_call.1} parent=11 // pred_region
          _
        $region28: #{tpu_custom_call.1} parent=11 // pred_fallthru
          _
      $region12: #{tpu_custom_call.1} parent=5 // pred_fallthru
        _
      %p177 = scmp.lt.s32.totalorder %s14, 2
      // Predicated region
      $region29: #{tpu_custom_call.1} parent=5 // pred_check
        %p178 = pneg %p177
      $region30: #{tpu_custom_call.1} parent=5 // pred_check_branch
        %180 = sbr.rel (%p178) target = $region32
      $region31: #{tpu_custom_call.1} parent=5 // pred_region
        // Predicated region
        $region33: #{tpu_custom_call.1} parent=31 // pred_check
          %p181 = pneg %p34
        $region34: #{tpu_custom_call.1} parent=31 // pred_check_branch
          %183 = sbr.rel (%p181) target = $region36
        $region35: #{tpu_custom_call.1} parent=31 // pred_region
          %p184 = scmp.lt.s32.totalorder %s14, 1
          %s185 = scalar_select %p184, %s14, 1
          %s186 = smul.addr %s185, 2
          %s187 = smul.addr %s186, 4
          %s188 = scalar_lea.vmem %s0, %s187
        $region36: #{tpu_custom_call.1} parent=31 // pred_fallthru
          _
      $region32: #{tpu_custom_call.1} parent=5 // pred_fallthru
        _
      %p189 = scmp.le.s32.totalorder 1, %s14
      %p190 = scmp.lt.s32.totalorder %s14, 3
      %p191 = pnand %p189, %p190
      %p192 = pneg %p191
      // Predicated region
      $region37: #{tpu_custom_call.1} parent=5 // pred_check
        _
      $region38: #{tpu_custom_call.1} parent=5 // pred_check_branch
        %194 = sbr.rel (%p191) target = $region40
      $region39: #{tpu_custom_call.1} parent=5 // pred_region
        %s195 = ssub.s32 %s14, 1
        %p196 = scmp.lt.s32.totalorder %s19, 1
        %s197 = scalar_select %p196, %s19, 1
        %s198 = smul.addr %s197, 2
        %s199 = smul.addr %s198, 4
        %s200 = scalar_lea.vmem %s0, %s199
        %p201 = pneg %p40
        %p202 = pneg %p37
        %p203 = pneg %p61
        %p204 = pneg %p58
        %p205 = pneg %p82
        %p206 = pneg %p79
        %p207 = pneg %p103
        %p208 = pneg %p100
        %p209 = pneg %p124
        %p210 = pneg %p121
        %p211 = pneg %p150
        %p212 = pneg %p147
        %s213 = sand.u32 %s137, 1
        %s214 = scalar_lea.sflag [#allocation3], %s213
        %s215 = sand.u32 %s137, 1
        %s216 = smul.addr %s215, 8
        %s217 = scalar_lea.vmem [#allocation2], %s216
        %p218 = scmp.lt.s32.totalorder %s19, 1
        %s219 = scalar_select %p218, %s19, 1
        %s220 = smul.addr %s219, 2
        %s221 = smul.addr %s220, 4
        %s222 = scalar_lea.vmem %s0, %s221
        %v223 = vld [vmem:[%s222] sm:$0xff]
        %v224 = vld [vmem:[%s1] sm:$0xff]
        %v225 = vld [vmem:[%s1 + $0x8] sm:$0xff]
        %v226 = vld [vmem:[%s1 + $0x10] sm:$0xff]
        %v227 = vld [vmem:[%s1 + $0x18] sm:$0xff]
        %v228 = vld [vmem:[%s1 + $0x20] sm:$0xff]
        %v229 = vld [vmem:[%s1 + $0x28] sm:$0xff]
        %v230 = vld [vmem:[%s1 + $0x30] sm:$0xff]
        %v231 = vld [vmem:[%s1 + $0x38] sm:$0xff]
        %v232 = vld [vmem:[%s1 + $0x40] sm:$0xff]
        %v233 = vld [vmem:[%s1 + $0x48] sm:$0xff]
        %v234 = vld [vmem:[%s1 + $0x50] sm:$0xff]
        %v235 = vld [vmem:[%s1 + $0x58] sm:$0xff]
        %v236 = vld [vmem:[%s1 + $0x60] sm:$0xff]
        %v237 = vld [vmem:[%s1 + $0x68] sm:$0xff]
        %v238 = vld [vmem:[%s1 + $0x70] sm:$0xff]
        %v239 = vld [vmem:[%s1 + $0x78] sm:$0xff]
        %v240 = vld [vmem:[%s1 + $0x80] sm:$0xff]
        %v241 = vld [vmem:[%s1 + $0x88] sm:$0xff]
        %v242 = vld [vmem:[%s1 + $0x90] sm:$0xff]
        %v243 = vld [vmem:[%s1 + $0x98] sm:$0xff]
        %v244 = vld [vmem:[%s1 + $0xa0] sm:$0xff]
        %v245 = vld [vmem:[%s1 + $0xa8] sm:$0xff]
        %v246 = vld [vmem:[%s1 + $0xb0] sm:$0xff]
        %v247 = vld [vmem:[%s1 + $0xb8] sm:$0xff]
        %v248 = vld [vmem:[%s1 + $0xc0] sm:$0xff]
        %v249 = vld [vmem:[%s1 + $0xc8] sm:$0xff]
        %v250 = vld [vmem:[%s1 + $0xd0] sm:$0xff]
        %v251 = vld [vmem:[%s1 + $0xd8] sm:$0xff]
        %v252 = vld [vmem:[%s1 + $0xe0] sm:$0xff]
        %v253 = vld [vmem:[%s1 + $0xe8] sm:$0xff]
        %v254 = vld [vmem:[%s1 + $0xf0] sm:$0xff]
        %v255 = vld [vmem:[%s1 + $0xf8] sm:$0xff]
        %v257 = vcombine.high %v223, %v223
        %259 = vmatprep.subr.mxu0 0.0
        %260 = vmatpush1.msra.mxu0 %v224
        %261 = vmatprep.subr.mxu0 0.0
        %262 = vmatpush1.msra.mxu0 %v225
        %263 = vmatprep.subr.mxu0 0.0
        %264 = vmatpush1.msra.mxu0 %v226
        %265 = vmatprep.subr.mxu0 0.0
        %266 = vmatpush1.msra.mxu0 %v227
        %267 = vmatprep.subr.mxu0 0.0
        %268 = vmatpush1.msra.mxu0 %v228
        %269 = vmatprep.subr.mxu0 0.0
        %270 = vmatpush1.msra.mxu0 %v229
        %271 = vmatprep.subr.mxu0 0.0
        %272 = vmatpush1.msra.mxu0 %v230
        %273 = vmatprep.subr.mxu0 0.0
        %274 = vmatpush1.msra.mxu0 %v231
        %275 = vmatprep.subr.mxu0 0.0
        %276 = vmatpush1.msra.mxu0 %v232
        %277 = vmatprep.subr.mxu0 0.0
        %278 = vmatpush1.msra.mxu0 %v233
        %279 = vmatprep.subr.mxu0 0.0
        %280 = vmatpush1.msra.mxu0 %v234
        %281 = vmatprep.subr.mxu0 0.0
        %282 = vmatpush1.msra.mxu0 %v235
        %283 = vmatprep.subr.mxu0 0.0
        %284 = vmatpush1.msra.mxu0 %v236
        %285 = vmatprep.subr.mxu0 0.0
        %286 = vmatpush1.msra.mxu0 %v237
        %287 = vmatprep.subr.mxu0 0.0
        %288 = vmatpush1.msra.mxu0 %v238
        %289 = vmatprep.subr.mxu0 0.0
        %290 = vmatpush1.msra.mxu0 %v239
        %291 = vmatprep.subr.mxu0 0.0
        %292 = vmatpush1.msra.mxu0 %v240
        %293 = vmatprep.subr.mxu0 0.0
        %294 = vmatpush1.msra.mxu0 %v241
        %295 = vmatprep.subr.mxu0 0.0
        %296 = vmatpush1.msra.mxu0 %v242
        %297 = vmatprep.subr.mxu0 0.0
        %298 = vmatpush1.msra.mxu0 %v243
        %299 = vmatprep.subr.mxu0 0.0
        %300 = vmatpush1.msra.mxu0 %v244
        %301 = vmatprep.subr.mxu0 0.0
        %302 = vmatpush1.msra.mxu0 %v245
        %303 = vmatprep.subr.mxu0 0.0
        %304 = vmatpush1.msra.mxu0 %v246
        %305 = vmatprep.subr.mxu0 0.0
        %306 = vmatpush1.msra.mxu0 %v247
        %307 = vmatprep.subr.mxu0 0.0
        %308 = vmatpush1.msra.mxu0 %v248
        %309 = vmatprep.subr.mxu0 0.0
        %310 = vmatpush1.msra.mxu0 %v249
        %311 = vmatprep.subr.mxu0 0.0
        %312 = vmatpush1.msra.mxu0 %v250
        %313 = vmatprep.subr.mxu0 0.0
        %314 = vmatpush1.msra.mxu0 %v251
        %315 = vmatprep.subr.mxu0 0.0
        %316 = vmatpush1.msra.mxu0 %v252
        %317 = vmatprep.subr.mxu0 0.0
        %318 = vmatpush1.msra.mxu0 %v253
        %319 = vmatprep.subr.mxu0 0.0
        %320 = vmatpush1.msra.mxu0 %v254
        %321 = vmatprep.subr.mxu0 0.0
        %322 = vmatpush1.msra.mxu0 %v255
        %323 = vmatprep.mubr.f32.mxu0 %v257
        %324 = vmatmul.mubr.f32.gmra.mrb[0].mxu0 %v223
        %v325 = vpop.f32.mrb[0].mxu0
        %v326 = vadd.f32 0.0, %v325
        %v327 = vpop.f32.mrb[0].mxu0
        %328 = vdwg.mxu0
        %v329 = vld [vmem:[%s2] sm:$0xf]
        %v330 = vld [vmem:[%s3] sm:$0xf]
        %332 = vset.pattern.permute.xlu0 0
        %333 = vperm.xlu0 %332, %v330
        %v334 = vpop.permute.xlu0 %333
        %vm336 = vcmask 31744
        %v338 = vsel %vm336, %v329, 0
        %vm340 = vcmask 1043456
        %v342 = vsel %vm340, %v326, 0
        %344 = vmatprep.subr.mxu0 0.0
        %345 = vmatpush1.msra.mxu0 %v342
        %346 = vmatprep.subr.mxu0 0.0
        %347 = vmatpush1.msra.mxu0 0.0
        %348 = vmatprep.subr.mxu0 0.0
        %349 = vmatpush1.msra.mxu0 0.0
        %350 = vmatprep.subr.mxu0 0.0
        %351 = vmatpush1.msra.mxu0 0.0
        %352 = vmatprep.subr.mxu0 0.0
        %353 = vmatpush1.msra.mxu0 0.0
        %354 = vmatprep.subr.mxu0 0.0
        %355 = vmatpush1.msra.mxu0 0.0
        %356 = vmatprep.subr.mxu0 0.0
        %357 = vmatpush1.msra.mxu0 0.0
        %358 = vmatprep.subr.mxu0 0.0
        %359 = vmatpush1.msra.mxu0 0.0
        %360 = vmatprep.subr.mxu0 0.0
        %361 = vmatpush1.msra.mxu0 0.0
        %362 = vmatprep.subr.mxu0 0.0
        %363 = vmatpush1.msra.mxu0 0.0
        %364 = vmatprep.subr.mxu0 0.0
        %365 = vmatpush1.msra.mxu0 0.0
        %366 = vmatprep.subr.mxu0 0.0
        %367 = vmatpush1.msra.mxu0 0.0
        %368 = vmatprep.subr.mxu0 0.0
        %369 = vmatpush1.msra.mxu0 0.0
        %370 = vmatprep.subr.mxu0 0.0
        %371 = vmatpush1.msra.mxu0 0.0
        %372 = vmatprep.subr.mxu0 0.0
        %373 = vmatpush1.msra.mxu0 0.0
        %374 = vmatprep.subr.mxu0 0.0
        %375 = vmatpush1.msra.mxu0 0.0
        %376 = vmatprep.subr.mxu0 0.0
        %377 = vmatpush1.msra.mxu0 0.0
        %378 = vmatprep.subr.mxu0 0.0
        %379 = vmatpush1.msra.mxu0 0.0
        %380 = vmatprep.subr.mxu0 0.0
        %381 = vmatpush1.msra.mxu0 0.0
        %382 = vmatprep.subr.mxu0 0.0
        %383 = vmatpush1.msra.mxu0 0.0
        %384 = vmatprep.subr.mxu0 0.0
        %385 = vmatpush1.msra.mxu0 0.0
        %386 = vmatprep.subr.mxu0 0.0
        %387 = vmatpush1.msra.mxu0 0.0
        %388 = vmatprep.subr.mxu0 0.0
        %389 = vmatpush1.msra.mxu0 0.0
        %390 = vmatprep.subr.mxu0 0.0
        %391 = vmatpush1.msra.mxu0 0.0
        %392 = vmatprep.subr.mxu0 0.0
        %393 = vmatpush1.msra.mxu0 0.0
        %394 = vmatprep.subr.mxu0 0.0
        %395 = vmatpush1.msra.mxu0 0.0
        %396 = vmatprep.subr.mxu0 0.0
        %397 = vmatpush1.msra.mxu0 0.0
        %398 = vmatprep.subr.mxu0 0.0
        %399 = vmatpush1.msra.mxu0 0.0
        %400 = vmatprep.subr.mxu0 0.0
        %401 = vmatpush1.msra.mxu0 0.0
        %402 = vmatprep.subr.mxu0 0.0
        %403 = vmatpush1.msra.mxu0 0.0
        %404 = vmatprep.subr.mxu0 0.0
        %405 = vmatpush1.msra.mxu0 0.0
        %406 = vmatprep.subr.mxu0 0.0
        %407 = vmatpush1.msra.mxu0 0.0
        %408 = vmatprep.mubr.f32.mxu0 0.0
        %409 = vmatmul.mubr.f32.gmra.mrb[0].mxu0 %v338
        %v410 = vpop.f32.mrb[0].mxu0
        %v411 = vadd.f32 %v334, %v410
        %v412 = vpop.f32.mrb[0].mxu0
        %413 = vdwg.mxu0
        %v414 = vmax.f32 %v411, 0.0
        %v415 = vld [vmem:[%s4] sm:$0xff]
        %v417 = vcombine.high %v415, %v415
        %v419 = vsel %vm336, %v414, 0
        %v421 = vsel %vm340, %v415, 0
        %v423 = vsel %vm340, %v417, 0
        %425 = vmatprep.subr.mxu0 %v423
        %426 = vmatpush1.msra.mxu0 %v421
        %427 = vmatprep.subr.mxu0 0.0
        %428 = vmatpush1.msra.mxu0 0.0
        %429 = vmatprep.subr.mxu0 0.0
        %430 = vmatpush1.msra.mxu0 0.0
        %431 = vmatprep.subr.mxu0 0.0
        %432 = vmatpush1.msra.mxu0 0.0
        %433 = vmatprep.subr.mxu0 0.0
        %434 = vmatpush1.msra.mxu0 0.0
        %435 = vmatprep.subr.mxu0 0.0
        %436 = vmatpush1.msra.mxu0 0.0
        %437 = vmatprep.subr.mxu0 0.0
        %438 = vmatpush1.msra.mxu0 0.0
        %439 = vmatprep.subr.mxu0 0.0
        %440 = vmatpush1.msra.mxu0 0.0
        %441 = vmatprep.subr.mxu0 0.0
        %442 = vmatpush1.msra.mxu0 0.0
        %443 = vmatprep.subr.mxu0 0.0
        %444 = vmatpush1.msra.mxu0 0.0
        %445 = vmatprep.subr.mxu0 0.0
        %446 = vmatpush1.msra.mxu0 0.0
        %447 = vmatprep.subr.mxu0 0.0
        %448 = vmatpush1.msra.mxu0 0.0
        %449 = vmatprep.subr.mxu0 0.0
        %450 = vmatpush1.msra.mxu0 0.0
        %451 = vmatprep.subr.mxu0 0.0
        %452 = vmatpush1.msra.mxu0 0.0
        %453 = vmatprep.subr.mxu0 0.0
        %454 = vmatpush1.msra.mxu0 0.0
        %455 = vmatprep.subr.mxu0 0.0
        %456 = vmatpush1.msra.mxu0 0.0
        %457 = vmatprep.subr.mxu0 0.0
        %458 = vmatpush1.msra.mxu0 0.0
        %459 = vmatprep.subr.mxu0 0.0
        %460 = vmatpush1.msra.mxu0 0.0
        %461 = vmatprep.subr.mxu0 0.0
        %462 = vmatpush1.msra.mxu0 0.0
        %463 = vmatprep.subr.mxu0 0.0
        %464 = vmatpush1.msra.mxu0 0.0
        %465 = vmatprep.subr.mxu0 0.0
        %466 = vmatpush1.msra.mxu0 0.0
        %467 = vmatprep.subr.mxu0 0.0
        %468 = vmatpush1.msra.mxu0 0.0
        %469 = vmatprep.subr.mxu0 0.0
        %470 = vmatpush1.msra.mxu0 0.0
        %471 = vmatprep.subr.mxu0 0.0
        %472 = vmatpush1.msra.mxu0 0.0
        %473 = vmatprep.subr.mxu0 0.0
        %474 = vmatpush1.msra.mxu0 0.0
        %475 = vmatprep.subr.mxu0 0.0
        %476 = vmatpush1.msra.mxu0 0.0
        %477 = vmatprep.subr.mxu0 0.0
        %478 = vmatpush1.msra.mxu0 0.0
        %479 = vmatprep.subr.mxu0 0.0
        %480 = vmatpush1.msra.mxu0 0.0
        %481 = vmatprep.subr.mxu0 0.0
        %482 = vmatpush1.msra.mxu0 0.0
        %483 = vmatprep.subr.mxu0 0.0
        %484 = vmatpush1.msra.mxu0 0.0
        %485 = vmatprep.subr.mxu0 0.0
        %486 = vmatpush1.msra.mxu0 0.0
        %487 = vmatprep.subr.mxu0 0.0
        %488 = vmatpush1.msra.mxu0 0.0
        %489 = vmatprep.mubr.f32.mxu0 0.0
        %490 = vmatmul.mubr.f32.gmra.mrb[0].mxu0 %v419
        %v491 = vpop.f32.mrb[0].mxu0
        %v492 = vadd.f32 0.0, %v491
        %v493 = vpop.f32.mrb[0].mxu0
        %v494 = vadd.f32 0.0, %v493
        %495 = vdwg.mxu0
        %v498 = vcombine.low %v492, %v494
        %500 = vst [vmem:[%s217] sm:$0xff] %v498
        %s501 = sand.u32 %s137, 1
        %s502 = scalar_lea.sflag [#allocation3], %s501
        %s503 = sand.u32 %s137, 1
        %s504 = smul.addr %s503, 8
        %s505 = scalar_lea.vmem [#allocation2], %s504
        // Predicated region
        $region41: #{tpu_custom_call.1} parent=39 // pred_check
          %p506 = pneg %p147
        $region42: #{tpu_custom_call.1} parent=39 // pred_check_branch
          %508 = sbr.rel (%p506) target = $region44
        $region43: #{tpu_custom_call.1} parent=39 // pred_region
          %s510 = ssub.s32 128, 128
          %511 = vsyncadd %s502, %s510
          %s512 = smul.addr %s19, 2
          %s513 = smul.addr %s512, 64
          %s514 = scalar_lea.hbm %s5, %s513
          %s516 = sshll.u32 %s505, 4
          %s517 = int_to_ptr.vmem [resolvable:$true] %s516
          %519 = dma.vmem_to_hbm [thread:$0]  %s517, 128, %s514, %s502
        $region44: #{tpu_custom_call.1} parent=39 // pred_fallthru
          _
      $region40: #{tpu_custom_call.1} parent=5 // pred_fallthru
        _
      %p520 = scmp.le.s32.totalorder 2, %s14
      // Predicated region
      $region45: #{tpu_custom_call.1} parent=5 // pred_check
        %p521 = pneg %p520
      $region46: #{tpu_custom_call.1} parent=5 // pred_check_branch
        %523 = sbr.rel (%p521) target = $region48
      $region47: #{tpu_custom_call.1} parent=5 // pred_region
        %s524 = ssub.s32 %s14, 2
        // Predicated region
        $region49: #{tpu_custom_call.1} parent=47 // pred_check
          %p525 = pneg %p153
        $region50: #{tpu_custom_call.1} parent=47 // pred_check_branch
          %527 = sbr.rel (%p525) target = $region52
        $region51: #{tpu_custom_call.1} parent=47 // pred_region
          %s528 = sand.u32 %s138, 1
          %s529 = scalar_lea.sflag [#allocation3], %s528
          %s530 = sand.u32 %s138, 1
          %s531 = smul.addr %s530, 8
          %s532 = scalar_lea.vmem [#allocation2], %s531
          %533 = dma.done %s529, 128
        $region52: #{tpu_custom_call.1} parent=47 // pred_fallthru
          _
      $region48: #{tpu_custom_call.1} parent=5 // pred_fallthru
        _
    $region6: #{tpu_custom_call.1} parent=1 // loop_footer
      %s18 = sadd.s32 1, %s14
    $region7: #{tpu_custom_call.1} parent=1 // loop_footer_branch
      %13 = sbr.rel target = $region3
    $region8: #{tpu_custom_call.1} parent=1 // loop_exit
      _
    %534 = vsyncpa [#allocation3], 1
    %s535 = scalar_lea.sflag [#allocation3], 1
    %536 = vsyncpa %s535, 1

</llo_original>
